<compile_context>
chip_gen: v5e
topology: v5e:2x2
jax: 0.10.0
libtpu: 0.0.40
codegen_flags: <defaults>
</compile_context>

<pallas_src>
import functools

import jax
import jax.numpy as jnp
import numpy as np
from jax.experimental import pallas as pl
from jax.experimental.pallas import tpu as pltpu


def _keep_topk_kernel(x_ref, o_ref, *, top_k, expert_axis):
    """Processes one tile.  `expert_axis` is the in-tile axis holding the E experts."""
    x = x_ref[...]
    neg_inf = jnp.array(-jnp.inf, dtype=x.dtype)

    red_shape = list(x.shape)
    red_shape[expert_axis] = 1
    red_shape = tuple(red_shape)

    xm = x                                               # working copy, maxima masked out
    cum = jnp.zeros(red_shape, jnp.int32)                # elements removed so far (per row)
    thresh = jnp.full(red_shape, neg_inf, x.dtype)

    # k rounds of (row-max, tie-aware mask-out).  `thresh` ends up as the value
    # of the k-th largest element (duplicates counted): it is the last row max
    # reached while fewer than top_k elements have been removed.  top_k is
    # small for MoE gating, so a static unrolled loop is fine.
    for it in range(top_k):
        m = jnp.max(xm, axis=expert_axis, keepdims=True)
        thresh = jnp.where(cum < top_k, m, thresh)
        if it + 1 < top_k:                               # last round only needs m/thresh
            eq = xm == m
            cum = cum + jnp.sum(eq.astype(jnp.int32), axis=expert_axis, keepdims=True)
            xm = jnp.where(eq, neg_inf, xm)

    o_ref[...] = jnp.where(x >= thresh, x, neg_inf).astype(o_ref.dtype)


def _row_block(n_rows, align, bytes_per_row, hard_cap=2048):
    """Rows per block: as large as practical (amortizes the ~0.35us/grid-step
    pipeline overhead), capped so one block stays ~<=2 MiB (double-buffered
    in/out fits the scoped-VMEM default and v7x's 64 MiB VMEM with headroom),
    and split >= 2 ways when there is enough work for v7x's two TensorCores.
    Returning the full axis extent is always layout-legal."""
    if n_rows <= max(2 * align, 256):
        return n_rows
    vmem_cap = max(align, ((2 << 20) // max(bytes_per_row, 1)) // align * align)
    half_up = -(-n_rows // 2)                    # ceil(n/2)
    blk = -(-half_up // align) * align           # round up to alignment
    return max(align, min(blk, vmem_cap, hard_cap))


def keep_top_k(x, top_k):
    """Pallas TPU implementation of KeepTopK.forward (functional, not in-place)."""
    if top_k == 0:
        return x
    if not jnp.issubdtype(x.dtype, jnp.floating):
        raise TypeError(f"keep_top_k needs a floating dtype (uses -inf fill), got {x.dtype}")

    orig_shape = x.shape
    E = orig_shape[-1]
    if top_k >= E:
        # k == E keeps every element (threshold is the row minimum); k > E would
        # be an error in torch.topk — treat both as identity.
        return x

    rows = int(np.prod(orig_shape[:-1])) if len(orig_shape) > 1 else 1
    x2 = x.reshape(rows, E)
    itemsize = jnp.dtype(x.dtype).itemsize

    params = pltpu.CompilerParams(dimension_semantics=("parallel",))

    if E < 128:
        # Lane-dense path: rows on the 128-lane minor axis, experts on sublanes.
        xt = jnp.swapaxes(x2, 0, 1)                       # (E, rows) — layout plumbing
        blk = _row_block(rows, 128, E * itemsize)
        grid = (pl.cdiv(rows, blk),)                      # ragged tail masked by Pallas
        out_t = pl.pallas_call(
            functools.partial(_keep_topk_kernel, top_k=top_k, expert_axis=0),
            out_shape=jax.ShapeDtypeStruct((E, rows), x.dtype),
            grid_spec=pltpu.PrefetchScalarGridSpec(
                num_scalar_prefetch=0,
                grid=grid,
                in_specs=[pl.BlockSpec((E, blk), lambda i: (0, i))],
                out_specs=pl.BlockSpec((E, blk), lambda i: (0, i)),
            ),
            compiler_params=params,
        )(xt)
        out = jnp.swapaxes(out_t, 0, 1)
    else:
        # E already fills the lane axis: keep the natural orientation.
        blk = _row_block(rows, 8, E * itemsize)
        grid = (pl.cdiv(rows, blk),)
        out = pl.pallas_call(
            functools.partial(_keep_topk_kernel, top_k=top_k, expert_axis=1),
            out_shape=jax.ShapeDtypeStruct((rows, E), x.dtype),
            grid_spec=pltpu.PrefetchScalarGridSpec(
                num_scalar_prefetch=0,
                grid=grid,
                in_specs=[pl.BlockSpec((blk, E), lambda i: (i, 0))],
                out_specs=pl.BlockSpec((blk, E), lambda i: (i, 0)),
            ),
            compiler_params=params,
        )(x2)

    return out.reshape(orig_shape)


def _reference(x, top_k):
    """Pure-JAX reference with the same semantics as the torch module."""
    if top_k == 0:
        return x
    thresh = jax.lax.top_k(x, top_k)[0][..., -1:]
    return jnp.where(x < thresh, -jnp.inf, x)


if __name__ == "__main__":
    key = jax.random.PRNGKey(0)

    # 1) MoE-gating-like input: (batch=2, seq=8, num_experts=32), top_k=4.
    x = jax.random.normal(key, (2, 8, 32), dtype=jnp.float32)
    y = jax.block_until_ready(keep_top_k(x, 4))
    np.testing.assert_allclose(np.asarray(y), np.asarray(_reference(x, 4)))

    # 2) Tie handling: quantized copies force duplicates at/above the threshold.
    #    Same shape/dtype/k as (1) -> reuses the compiled kernel.
    x_tie = jnp.round(x * 2.0) / 2.0
    y_tie = jax.block_until_ready(keep_top_k(x_tie, 4))
    np.testing.assert_allclose(np.asarray(y_tie), np.asarray(_reference(x_tie, 4)))

    # 3) Wide expert axis (E >= 128 -> natural lane-dense orientation).
    x_wide = jax.random.normal(jax.random.PRNGKey(1), (2, 8, 128), dtype=jnp.float32)
    y_wide = jax.block_until_ready(keep_top_k(x_wide, 8))
    np.testing.assert_allclose(np.asarray(y_wide), np.asarray(_reference(x_wide, 8)))

    # 4) bf16 input (compute stays in bf16; compares/maxes are exact).
    x_bf = x.astype(jnp.bfloat16)
    y_bf = jax.block_until_ready(keep_top_k(x_bf, 4))
    np.testing.assert_allclose(
        np.asarray(y_bf.astype(jnp.float32)),
        np.asarray(_reference(x_bf, 4).astype(jnp.float32)))

    # 5) top_k == 0 is the identity (matches the torch early-return).
    assert jnp.array_equal(keep_top_k(x, 0), x)

    print("KERNEL_OK")
</pallas_src>

<mosaic_0001>
module attributes {stable_mosaic.version = 11 : i64} {
  func.func @_keep_topk_kernel(%arg0: i32, %arg1: memref<32x16xf32, #tpu.memory_space<vmem>>, %arg2: memref<32x16xf32, #tpu.memory_space<vmem>>) attributes {dimension_semantics = [#tpu.dimension_semantics<parallel>], iteration_bounds = array<i64: 1>, scalar_prefetch = 0 : i64, scratch_operands = 0 : i64, tpu.core_type = #tpu.core_type<tc>, window_params = [{transform_indices = @transform_0, window_bounds = array<i64: 32, 16>}, {transform_indices = @transform_1, window_bounds = array<i64: 32, 16>}]} {
    %c0 = arith.constant 0 : index
    %c0_0 = arith.constant 0 : index
    %0 = vector.load %arg1[%c0, %c0_0] : memref<32x16xf32, #tpu.memory_space<vmem>>, vector<32x16xf32>
    %c0_i32 = arith.constant 0 : i32
    %1 = vector.broadcast %c0_i32 : i32 to vector<1x16xi32>
    %cst = arith.constant 0xFF800000 : f32
    %2 = vector.broadcast %cst : f32 to vector<1x16xf32>
    %cst_1 = arith.constant dense<0xFF800000> : vector<16xf32>
    %3 = vector.multi_reduction <maximumf>, %0, %cst_1 [0] : vector<32x16xf32> to vector<16xf32>
    %4 = vector.shape_cast %3 : vector<16xf32> to vector<1x16xf32>
    %c4_i32 = arith.constant 4 : i32
    %5 = vector.broadcast %c4_i32 : i32 to vector<1x16xi32>
    %6 = arith.cmpi slt, %1, %5 : vector<1x16xi32>
    %7 = arith.select %6, %4, %2 : vector<1x16xi1>, vector<1x16xf32>
    %8 = vector.broadcast %4 : vector<1x16xf32> to vector<32x16xf32>
    %9 = arith.cmpf oeq, %0, %8 : vector<32x16xf32>
    %10 = arith.extui %9 : vector<32x16xi1> to vector<32x16xi32>
    %cst_2 = arith.constant dense<0> : vector<16xi32>
    %11 = vector.multi_reduction <add>, %10, %cst_2 [0] : vector<32x16xi32> to vector<16xi32>
    %12 = vector.shape_cast %11 : vector<16xi32> to vector<1x16xi32>
    %13 = arith.addi %1, %12 : vector<1x16xi32>
    %cst_3 = arith.constant 0xFF800000 : f32
    %14 = vector.broadcast %cst_3 : f32 to vector<32x16xf32>
    %15 = arith.select %9, %14, %0 : vector<32x16xi1>, vector<32x16xf32>
    %cst_4 = arith.constant dense<0xFF800000> : vector<16xf32>
    %16 = vector.multi_reduction <maximumf>, %15, %cst_4 [0] : vector<32x16xf32> to vector<16xf32>
    %17 = vector.shape_cast %16 : vector<16xf32> to vector<1x16xf32>
    %c4_i32_5 = arith.constant 4 : i32
    %18 = vector.broadcast %c4_i32_5 : i32 to vector<1x16xi32>
    %19 = arith.cmpi slt, %13, %18 : vector<1x16xi32>
    %20 = arith.select %19, %17, %7 : vector<1x16xi1>, vector<1x16xf32>
    %21 = vector.broadcast %17 : vector<1x16xf32> to vector<32x16xf32>
    %22 = arith.cmpf oeq, %15, %21 : vector<32x16xf32>
    %23 = arith.extui %22 : vector<32x16xi1> to vector<32x16xi32>
    %cst_6 = arith.constant dense<0> : vector<16xi32>
    %24 = vector.multi_reduction <add>, %23, %cst_6 [0] : vector<32x16xi32> to vector<16xi32>
    %25 = vector.shape_cast %24 : vector<16xi32> to vector<1x16xi32>
    %26 = arith.addi %13, %25 : vector<1x16xi32>
    %cst_7 = arith.constant 0xFF800000 : f32
    %27 = vector.broadcast %cst_7 : f32 to vector<32x16xf32>
    %28 = arith.select %22, %27, %15 : vector<32x16xi1>, vector<32x16xf32>
    %cst_8 = arith.constant dense<0xFF800000> : vector<16xf32>
    %29 = vector.multi_reduction <maximumf>, %28, %cst_8 [0] : vector<32x16xf32> to vector<16xf32>
    %30 = vector.shape_cast %29 : vector<16xf32> to vector<1x16xf32>
    %c4_i32_9 = arith.constant 4 : i32
    %31 = vector.broadcast %c4_i32_9 : i32 to vector<1x16xi32>
    %32 = arith.cmpi slt, %26, %31 : vector<1x16xi32>
    %33 = arith.select %32, %30, %20 : vector<1x16xi1>, vector<1x16xf32>
    %34 = vector.broadcast %30 : vector<1x16xf32> to vector<32x16xf32>
    %35 = arith.cmpf oeq, %28, %34 : vector<32x16xf32>
    %36 = arith.extui %35 : vector<32x16xi1> to vector<32x16xi32>
    %cst_10 = arith.constant dense<0> : vector<16xi32>
    %37 = vector.multi_reduction <add>, %36, %cst_10 [0] : vector<32x16xi32> to vector<16xi32>
    %38 = vector.shape_cast %37 : vector<16xi32> to vector<1x16xi32>
    %39 = arith.addi %26, %38 : vector<1x16xi32>
    %cst_11 = arith.constant 0xFF800000 : f32
    %40 = vector.broadcast %cst_11 : f32 to vector<32x16xf32>
    %41 = arith.select %35, %40, %28 : vector<32x16xi1>, vector<32x16xf32>
    %cst_12 = arith.constant dense<0xFF800000> : vector<16xf32>
    %42 = vector.multi_reduction <maximumf>, %41, %cst_12 [0] : vector<32x16xf32> to vector<16xf32>
    %43 = vector.shape_cast %42 : vector<16xf32> to vector<1x16xf32>
    %c4_i32_13 = arith.constant 4 : i32
    %44 = vector.broadcast %c4_i32_13 : i32 to vector<1x16xi32>
    %45 = arith.cmpi slt, %39, %44 : vector<1x16xi32>
    %46 = arith.select %45, %43, %33 : vector<1x16xi1>, vector<1x16xf32>
    %47 = vector.broadcast %46 : vector<1x16xf32> to vector<32x16xf32>
    %48 = arith.cmpf oge, %0, %47 : vector<32x16xf32>
    %cst_14 = arith.constant 0xFF800000 : f32
    %49 = vector.broadcast %cst_14 : f32 to vector<32x16xf32>
    %50 = arith.select %48, %0, %49 : vector<32x16xi1>, vector<32x16xf32>
    %c0_15 = arith.constant 0 : index
    %c0_16 = arith.constant 0 : index
    %51 = vector.load %arg2[%c0_15, %c0_16] : memref<32x16xf32, #tpu.memory_space<vmem>>, vector<32x16xf32>
    tpu.vector_store %arg2[%c0_15, %c0_16], %50 {strides = array<i32>} : memref<32x16xf32, #tpu.memory_space<vmem>>, vector<32x16xf32>,
    return
  }
  func.func @transform_0(%arg0: i32) -> (i32, i32) {
    %c0_i32 = arith.constant 0 : i32
    %c0_i32_0 = arith.constant 0 : i32
    return %c0_i32, %arg0 : i32, i32
  }
  func.func @transform_1(%arg0: i32) -> (i32, i32) {
    %c0_i32 = arith.constant 0 : i32
    %c0_i32_0 = arith.constant 0 : i32
    return %c0_i32, %arg0 : i32, i32
  }
}

</mosaic_0001>

<llo_original>
// kernel: tpu_custom_call.1
$region0: #{tpu_custom_call.1}
  #allocation0 [shape = 'u32[]', space=smem, size = 0x4, offset = 0x4, fixed_abs, tag = 'smem constant byte address 0x4 - core index']
  #allocation1 [shape = 'u32[72,128]{1,0:T(1,128)}', space=vmem, size = 0x9000, scoped, tag = 'internal scratch']
  %s0 = inlined_call_operand.vmem [shape: f32[32,16], index: 0, kind: input, shape index: {}]
  %s1 = inlined_call_operand.vmem [shape: f32[32,16], index: 1, kind: output, shape index: {}]
  %s2 = sld [smem:[#allocation0]]
  $region14: #{tpu_custom_call.1} parent=0
    _
  %s4 = ssub.s32 1, %s2
  %s5 = scalar_select 0, %s4, %s2
  // Predicated region
  $region2: #{tpu_custom_call.1} parent=0 // pred_check
    _
  $region3: #{tpu_custom_call.1} parent=0 // pred_check_branch
    %7 = sbr.rel (0) target = $region5
  $region4: #{tpu_custom_call.1} parent=0 // pred_region
    _
  $region5: #{tpu_custom_call.1} parent=0 // pred_fallthru
    _
  %v8 = vld [vmem:[%s0] sm:$0xff]
  %v9 = vld [vmem:[%s0 + $0x8] sm:$0xff]
  %v10 = vld [vmem:[%s0 + $0x10] sm:$0xff]
  %v11 = vld [vmem:[%s0 + $0x18] sm:$0xff]
  %vm12 = vcmask 130048
  %v13 = vsel %vm12, %v8, -inf
  %v14 = vsel %vm12, %v9, -inf
  %v15 = vsel %vm12, %v10, -inf
  %v16 = vsel %vm12, %v11, -inf
  %v17 = vmax.f32 %v13, %v14
  %v18 = vmax.f32 %v15, %v16
  %v19 = vmax.f32 %v17, %v18
  %v20 = vrot.slane %v19, 4
  %v21 = vmax.f32 %v19, %v20
  %v22 = vrot.slane %v21, 2
  %v23 = vmax.f32 %v21, %v22
  %v24 = vrot.slane %v23, 1
  %v25 = vmax.f32 %v23, %v24
  %vm26 = vcmp.eq.f32.partialorder %v8, %v25
  %vm27 = vcmp.eq.f32.partialorder %v9, %v25
  %vm28 = vcmp.eq.f32.partialorder %v10, %v25
  %vm29 = vcmp.eq.f32.partialorder %v11, %v25
  %v30 = vsel %vm26, 1, 0
  %v31 = vsel %vm27, 1, 0
  %v32 = vsel %vm28, 1, 0
  %v33 = vsel %vm29, 1, 0
  %v34 = vsel %vm12, %v30, 0
  %v35 = vsel %vm12, %v31, 0
  %v36 = vsel %vm12, %v32, 0
  %v37 = vsel %vm12, %v33, 0
  %v38 = vadd.s32 %v34, %v35
  %v39 = vadd.s32 %v36, %v37
  %v40 = vadd.s32 %v38, %v39
  %v41 = vrot.slane %v40, 4
  %v42 = vadd.s32 %v40, %v41
  %v43 = vrot.slane %v42, 2
  %v44 = vadd.s32 %v42, %v43
  %v45 = vrot.slane %v44, 1
  %v46 = vadd.s32 %v44, %v45
  %v47 = vsel %vm26, -inf, %v8
  %v48 = vsel %vm27, -inf, %v9
  %v49 = vsel %vm28, -inf, %v10
  %v50 = vsel %vm29, -inf, %v11
  %v51 = vsel %vm12, %v47, -inf
  %v52 = vsel %vm12, %v48, -inf
  %v53 = vsel %vm12, %v49, -inf
  %v54 = vsel %vm12, %v50, -inf
  %v55 = vmax.f32 %v51, %v52
  %v56 = vmax.f32 %v53, %v54
  %v57 = vmax.f32 %v55, %v56
  %v58 = vrot.slane %v57, 4
  %v59 = vmax.f32 %v57, %v58
  %v60 = vrot.slane %v59, 2
  %v61 = vmax.f32 %v59, %v60
  %v62 = vrot.slane %v61, 1
  %v63 = vmax.f32 %v61, %v62
  %vm64 = vcmp.lt.s32.totalorder %v46, 4
  %v65 = vsel %vm64, %v63, %v25
  %vm66 = vcmp.eq.f32.partialorder %v47, %v63
  %vm67 = vcmp.eq.f32.partialorder %v48, %v63
  %vm68 = vcmp.eq.f32.partialorder %v49, %v63
  %vm69 = vcmp.eq.f32.partialorder %v50, %v63
  %v70 = vsel %vm66, 1, 0
  %v71 = vsel %vm67, 1, 0
  %v72 = vsel %vm68, 1, 0
  %v73 = vsel %vm69, 1, 0
  %v74 = vsel %vm12, %v70, 0
  %v75 = vsel %vm12, %v71, 0
  %v76 = vsel %vm12, %v72, 0
  %v77 = vsel %vm12, %v73, 0
  %v78 = vadd.s32 %v74, %v75
  %v79 = vadd.s32 %v76, %v77
  %v80 = vadd.s32 %v78, %v79
  %v81 = vrot.slane %v80, 4
  %v82 = vadd.s32 %v80, %v81
  %v83 = vrot.slane %v82, 2
  %v84 = vadd.s32 %v82, %v83
  %v85 = vrot.slane %v84, 1
  %v86 = vadd.s32 %v84, %v85
  %v87 = vadd.s32 %v46, %v86
  %v88 = vsel %vm66, -inf, %v47
  %v89 = vsel %vm67, -inf, %v48
  %v90 = vsel %vm68, -inf, %v49
  %v91 = vsel %vm69, -inf, %v50
  %v92 = vsel %vm12, %v88, -inf
  %v93 = vsel %vm12, %v89, -inf
  %v94 = vsel %vm12, %v90, -inf
  %v95 = vsel %vm12, %v91, -inf
  %v96 = vmax.f32 %v92, %v93
  %v97 = vmax.f32 %v94, %v95
  %v98 = vmax.f32 %v96, %v97
  %v99 = vrot.slane %v98, 4
  %v100 = vmax.f32 %v98, %v99
  %v101 = vrot.slane %v100, 2
  %v102 = vmax.f32 %v100, %v101
  %v103 = vrot.slane %v102, 1
  %v104 = vmax.f32 %v102, %v103
  %vm105 = vcmp.lt.s32.totalorder %v87, 4
  %v106 = vsel %vm105, %v104, %v65
  %vm107 = vcmp.eq.f32.partialorder %v88, %v104
  %vm108 = vcmp.eq.f32.partialorder %v89, %v104
  %vm109 = vcmp.eq.f32.partialorder %v90, %v104
  %vm110 = vcmp.eq.f32.partialorder %v91, %v104
  %v111 = vsel %vm107, 1, 0
  %v112 = vsel %vm108, 1, 0
  %v113 = vsel %vm109, 1, 0
  %v114 = vsel %vm110, 1, 0
  %v115 = vsel %vm12, %v111, 0
  %v116 = vsel %vm12, %v112, 0
  %v117 = vsel %vm12, %v113, 0
  %v118 = vsel %vm12, %v114, 0
  %v119 = vadd.s32 %v115, %v116
  %v120 = vadd.s32 %v117, %v118
  %v121 = vadd.s32 %v119, %v120
  %v122 = vrot.slane %v121, 4
  %v123 = vadd.s32 %v121, %v122
  %v124 = vrot.slane %v123, 2
  %v125 = vadd.s32 %v123, %v124
  %v126 = vrot.slane %v125, 1
  %v127 = vadd.s32 %v125, %v126
  %v128 = vadd.s32 %v87, %v127
  %v129 = vsel %vm107, -inf, %v88
  %v130 = vsel %vm108, -inf, %v89
  %v131 = vsel %vm109, -inf, %v90
  %v132 = vsel %vm110, -inf, %v91
  %v133 = vsel %vm12, %v129, -inf
  %v134 = vsel %vm12, %v130, -inf
  %v135 = vsel %vm12, %v131, -inf
  %v136 = vsel %vm12, %v132, -inf
  %v137 = vmax.f32 %v133, %v134
  %v138 = vmax.f32 %v135, %v136
  %v139 = vmax.f32 %v137, %v138
  %v140 = vrot.slane %v139, 4
  %v141 = vmax.f32 %v139, %v140
  %v142 = vrot.slane %v141, 2
  %v143 = vmax.f32 %v141, %v142
  %v144 = vrot.slane %v143, 1
  %v145 = vmax.f32 %v143, %v144
  %vm146 = vcmp.lt.s32.totalorder %v128, 4
  %v147 = vsel %vm146, %v145, %v106
  %vm148 = vcmp.ge.f32.partialorder %v8, %v147
  %vm149 = vcmp.ge.f32.partialorder %v9, %v147
  %vm150 = vcmp.ge.f32.partialorder %v10, %v147
  %vm151 = vcmp.ge.f32.partialorder %v11, %v147
  %v152 = vsel %vm148, %v8, -inf
  %v153 = vsel %vm149, %v9, -inf
  %v154 = vsel %vm150, %v10, -inf
  %v155 = vsel %vm151, %v11, -inf
  %156 = vst.msk [vmem:[%s1] sm:$0xff] %vm12, %v152
  %157 = vst.msk [vmem:[%s1 + $0x8] sm:$0xff] %vm12, %v153
  %158 = vst.msk [vmem:[%s1 + $0x10] sm:$0xff] %vm12, %v154
  %159 = vst.msk [vmem:[%s1 + $0x18] sm:$0xff] %vm12, %v155
  // Predicated region
  $region6: #{tpu_custom_call.1} parent=0 // pred_check
    _
  $region7: #{tpu_custom_call.1} parent=0 // pred_check_branch
    %161 = sbr.rel (0) target = $region9
  $region8: #{tpu_custom_call.1} parent=0 // pred_region
    _
  $region9: #{tpu_custom_call.1} parent=0 // pred_fallthru
    _
  // Predicated region
  $region10: #{tpu_custom_call.1} parent=0 // pred_check
    _
  $region11: #{tpu_custom_call.1} parent=0 // pred_check_branch
    %163 = sbr.rel (0) target = $region13
  $region12: #{tpu_custom_call.1} parent=0 // pred_region
    _
  $region13: #{tpu_custom_call.1} parent=0 // pred_fallthru
    _

</llo_original>
